<compile_context>
chip_gen: v6e
topology: v6e:2x2x1
jax: 0.10.0
libtpu: 0.0.40
codegen_flags: <defaults>
</compile_context>

<pallas_src>
import functools

import jax
import jax.numpy as jnp
from jax import lax
from jax.experimental import pallas as pl
from jax.experimental.pallas import tpu as pltpu

EPS = 0.001

# VMEM budgets chosen for the smallest generation (v7x: 64 MiB physical,
# 32 MiB scoped default); the explicit override also raises v5e's 16 MiB
# default so the larger tiles are legal there.
_VMEM_LIMIT_FUSED = 40 * 1024 * 1024
_VMEM_LIMIT_TWO_PASS = 32 * 1024 * 1024

# Fused path: the whole (N, Cb, HW) channel-block slab sits in VMEM.
# Footprint ~ 2x in + 2x out (double buffering) + ~2x f32 temps, so a 4 MiB
# f32 slab keeps the worst case near ~24 MiB, inside the 40 MiB limit.
_FUSED_SLAB_F32_BYTES = 4 * 1024 * 1024

# Two-pass fallback: ~2 MiB x-blocks (measured 1-4 MiB blocks reach ~85% of
# HBM roofline; smaller tiles are dominated by the 0.35 us step overhead).
_TARGET_BLOCK_BYTES = 2 * 1024 * 1024


def _divisor_tile(dim, unit, cap):
    """Largest multiple of `unit` that divides `dim` and is <= cap.

    Falls back to the full dimension when `dim` is not a multiple of `unit`
    (full-extent blocks are always legal), and to `unit` when no multiple
    of `unit` <= cap divides `dim`.
    """
    if dim % unit != 0:
        return dim
    best = unit
    t = unit
    limit = min(dim, cap)
    while t <= limit:
        if dim % t == 0:
            best = t
        t += unit
    return best


def _fused_channel_block(C, per_channel_f32_bytes, budget, sub_unit):
    """Channel-block size for the fused single-pass path, or None if the
    per-channel-block slab cannot fit the VMEM budget."""
    if per_channel_f32_bytes > budget:
        return None
    if C % sub_unit != 0:
        # (8,128) rule: a non-multiple channel block must span the full C.
        return C if C * per_channel_f32_bytes <= budget else None
    cap = C
    if C >= 2 * sub_unit:
        cap = C // 2  # >= 2 channel blocks -> both v7x TensorCores busy
    cap = min(cap, max(sub_unit, budget // per_channel_f32_bytes))
    cb = _divisor_tile(C, sub_unit, cap)
    if cb * per_channel_f32_bytes > budget:
        return None
    return cb


# ---------------------------------------------------------------------------
# Fused single-pass kernel: grid = (C // Cb,); the whole (N, Cb, HW) slab is
# in VMEM, so x is read from HBM exactly once and written exactly once.
# ---------------------------------------------------------------------------
def _fused_kernel(w_ref, gamma_ref, beta_ref, x_ref, o_ref, *, inv_count):
    # w_ref: SMEM (2,) = [w_0, w_1]; gamma/beta: VMEM (Cb, 1)
    # x_ref / o_ref: VMEM (N, Cb, HW)
    x = x_ref[...].astype(jnp.float32)                       # (N, Cb, HW)

    # Mean, then centered variance (numerically robust; extra pass is over
    # VMEM only, so it is free relative to the HBM DMA).
    s = jnp.sum(jnp.sum(x, axis=0), axis=1, keepdims=True)   # (Cb, 1)
    mean = s * inv_count
    d = x - mean[None]                                       # (N, Cb, HW)
    var = jnp.sum(jnp.sum(d * d, axis=0), axis=1, keepdims=True) * inv_count
    inv_std = lax.rsqrt(var + EPS)

    g = gamma_ref[...].astype(jnp.float32)                   # (Cb, 1)
    b = beta_ref[...].astype(jnp.float32)
    w0 = w_ref[0]
    w1 = w_ref[1]
    # Fold the whole op into one per-channel affine: 2 VALU ops / element.
    scale = w0 + w1 * g * inv_std                            # (Cb, 1)
    bias = w1 * (b - g * mean * inv_std)
    o_ref[...] = (x * scale[None] + bias[None]).astype(o_ref.dtype)


# ---------------------------------------------------------------------------
# Two-pass fallback, pass 1: per-channel stats -> folded scale / bias.
#   grid = (C//Cb, N//Nb, HW//HWt); semantics ("parallel","arbitrary","arbitrary")
# ---------------------------------------------------------------------------
def _stats_kernel(w_ref, gamma_ref, beta_ref, x_ref, scale_ref, bias_ref,
                  acc_sum, acc_sq, *, inv_count):
    n = pl.program_id(1)
    m = pl.program_id(2)

    @pl.when(jnp.logical_and(n == 0, m == 0))
    def _():
        acc_sum[...] = jnp.zeros_like(acc_sum)
        acc_sq[...] = jnp.zeros_like(acc_sq)

    x = x_ref[...].astype(jnp.float32)                       # (Nb, Cb, HWt)
    # Pure-VALU accumulation into (Cb, HWt) lane-wide partials; the cross-lane
    # (XLU) reduction runs only once, in the finalize below.
    acc_sum[...] += jnp.sum(x, axis=0)
    acc_sq[...] += jnp.sum(x * x, axis=0)

    is_last = jnp.logical_and(n == pl.num_programs(1) - 1,
                              m == pl.num_programs(2) - 1)

    @pl.when(is_last)
    def _():
        s = jnp.sum(acc_sum[...], axis=1, keepdims=True)     # (Cb, 1)
        sq = jnp.sum(acc_sq[...], axis=1, keepdims=True)
        mean = s * inv_count
        var = jnp.maximum(sq * inv_count - mean * mean, 0.0)  # clamp >= 0
        inv_std = lax.rsqrt(var + EPS)
        g = gamma_ref[...].astype(jnp.float32)
        b = beta_ref[...].astype(jnp.float32)
        w0 = w_ref[0]
        w1 = w_ref[1]
        scale_ref[...] = w0 + w1 * g * inv_std
        bias_ref[...] = w1 * (b - g * mean * inv_std)


# ---------------------------------------------------------------------------
# Two-pass fallback, pass 2: out = scale * x + bias (fully parallel).
# ---------------------------------------------------------------------------
def _apply_kernel(scale_ref, bias_ref, x_ref, o_ref):
    s = scale_ref[...][None]                                 # (1, Cb, 1) f32
    b = bias_ref[...][None]
    x = x_ref[...].astype(jnp.float32)                       # (Nb, Cb, HWt)
    o_ref[...] = (x * s + b).astype(o_ref.dtype)


def adaptive_norm(x, w0, w1, gamma, beta, *, force_two_pass=False):
    """x: (N, C, H, W). Returns w0*x + w1*BatchNorm2d(x), same shape/dtype."""
    N, C, H, W = x.shape
    HW = H * W

    # Free, contiguous view: no transpose, no extra HBM traffic.
    x3d = x.reshape(N, C, HW)
    itemsize = jnp.dtype(x.dtype).itemsize
    # Sublane packing unit: f32 -> 8, bf16 -> 16, int8/fp8 -> 32.
    sub_unit = max(8, 32 // itemsize)

    w = jnp.stack([jnp.asarray(w0, jnp.float32).reshape(()),
                   jnp.asarray(w1, jnp.float32).reshape(())])
    gamma2d = jnp.asarray(gamma, jnp.float32).reshape(C, 1)
    beta2d = jnp.asarray(beta, jnp.float32).reshape(C, 1)
    inv_count = 1.0 / float(N * HW)

    # ----------------------- fused single-pass path -------------------------
    cb_fused = None if force_two_pass else _fused_channel_block(
        C, N * HW * 4, _FUSED_SLAB_F32_BYTES, sub_unit)
    if cb_fused is not None:
        c_blocks = C // cb_fused
        cvec = pl.BlockSpec((cb_fused, 1), lambda c: (c, 0))
        xspec = pl.BlockSpec((N, cb_fused, HW), lambda c: (0, c, 0))
        out3d = pl.pallas_call(
            functools.partial(_fused_kernel, inv_count=inv_count),
            grid=(c_blocks,),
            in_specs=[pl.BlockSpec(memory_space=pltpu.MemorySpace.SMEM),
                      cvec, cvec, xspec],
            out_specs=xspec,
            out_shape=jax.ShapeDtypeStruct((N, C, HW), x.dtype),
            compiler_params=pltpu.CompilerParams(
                dimension_semantics=("parallel",),
                vmem_limit_bytes=_VMEM_LIMIT_FUSED),
        )(w, gamma2d, beta2d, x3d)
        return out3d.reshape(N, C, H, W)

    # --------------------------- two-pass fallback ---------------------------
    # Channel block: multiple of the sublane unit (or full C); capped at C//2
    # so pass 1 keeps >= 2 "parallel" blocks for v7x's two TensorCores.
    if C % sub_unit == 0:
        cb_cap = C // 2 if C >= 2 * sub_unit else C
        Cb = _divisor_tile(C, sub_unit, cb_cap)
    else:
        Cb = C
    # Spatial block: lane-dense (multiple of 128) whenever HW allows.
    if HW % 128 == 0:
        hwt_cap = max(128, _TARGET_BLOCK_BYTES // (Cb * itemsize))
        HWt = _divisor_tile(HW, 128, hwt_cap)
    else:
        # Common CNN case (HW = 49/196/784/...): keep the full spatial extent
        # (legal full-dim block) and let Nb below restore ~2 MiB blocks.
        # TODO(synk): a lane-dense output re-layout would remove the masked
        # vst tail for non-128-multiple HW.
        HWt = HW
    nb_cap = max(1, _TARGET_BLOCK_BYTES // (Cb * HWt * itemsize))
    Nb = _divisor_tile(N, 1, min(nb_cap, N))

    c_blocks, n_blocks, hw_blocks = C // Cb, N // Nb, HW // HWt

    cvec3 = pl.BlockSpec((Cb, 1), lambda c, n, m: (c, 0))
    x_spec = pl.BlockSpec((Nb, Cb, HWt), lambda c, n, m: (n, c, m))

    # ---- pass 1: statistics + fold into per-channel scale / bias ----------
    scale, bias = pl.pallas_call(
        functools.partial(_stats_kernel, inv_count=inv_count),
        grid=(c_blocks, n_blocks, hw_blocks),
        in_specs=[pl.BlockSpec(memory_space=pltpu.MemorySpace.SMEM),  # w
                  cvec3,                                              # gamma
                  cvec3,                                              # beta
                  x_spec],                                            # x tile
        out_specs=[cvec3, cvec3],
        out_shape=(jax.ShapeDtypeStruct((C, 1), jnp.float32),
                   jax.ShapeDtypeStruct((C, 1), jnp.float32)),
        scratch_shapes=[pltpu.VMEM((Cb, HWt), jnp.float32),   # sum partials
                        pltpu.VMEM((Cb, HWt), jnp.float32)],  # sumsq partials
        compiler_params=pltpu.CompilerParams(
            dimension_semantics=("parallel", "arbitrary", "arbitrary"),
            vmem_limit_bytes=_VMEM_LIMIT_TWO_PASS),
    )(w, gamma2d, beta2d, x3d)

    # ---- pass 2: apply the per-channel affine ------------------------------
    out3d = pl.pallas_call(
        _apply_kernel,
        grid=(c_blocks, n_blocks, hw_blocks),
        in_specs=[cvec3, cvec3, x_spec],
        out_specs=x_spec,
        out_shape=jax.ShapeDtypeStruct((N, C, HW), x.dtype),
        compiler_params=pltpu.CompilerParams(
            dimension_semantics=("parallel", "parallel", "parallel"),
            vmem_limit_bytes=_VMEM_LIMIT_TWO_PASS),
    )(scale, bias, x3d)

    return out3d.reshape(N, C, H, W)


def _reference(x, w0, w1, gamma, beta):
    # Pure-JAX reference matching PyTorch training-mode BatchNorm2d.
    mean = jnp.mean(x, axis=(0, 2, 3), keepdims=True)
    var = jnp.mean((x - mean) ** 2, axis=(0, 2, 3), keepdims=True)
    bn = gamma.reshape(1, -1, 1, 1) * (x - mean) / jnp.sqrt(var + EPS) \
        + beta.reshape(1, -1, 1, 1)
    return w0 * x + w1 * bn


if __name__ == "__main__":
    key = jax.random.PRNGKey(0)
    N, C, H, W = 2, 4, 16, 16
    kx, kg, kb = jax.random.split(key, 3)
    x = jax.random.normal(kx, (N, C, H, W), dtype=jnp.float32)

    # Non-trivial BN affine params to exercise the gamma/beta path.
    gamma = 1.0 + 0.1 * jax.random.normal(kg, (C,), dtype=jnp.float32)
    beta = 0.1 * jax.random.normal(kb, (C,), dtype=jnp.float32)

    # nn.Module __init__ defaults: w_0 = 1, w_1 = 0.
    w0_init = jnp.array(1.0, dtype=jnp.float32)
    w1_init = jnp.array(0.0, dtype=jnp.float32)
    out = adaptive_norm(x, w0_init, w1_init, gamma, beta)
    jax.block_until_ready(out)
    ref = _reference(x, w0_init, w1_init, gamma, beta)
    assert jnp.allclose(out, ref, atol=1e-5, rtol=1e-5)

    # Non-default mixing weights (exercises the BN branch), fused path.
    w0 = jnp.array(0.7, dtype=jnp.float32)
    w1 = jnp.array(0.3, dtype=jnp.float32)
    out_f = adaptive_norm(x, w0, w1, gamma, beta)
    jax.block_until_ready(out_f)
    ref_mix = _reference(x, w0, w1, gamma, beta)
    assert jnp.allclose(out_f, ref_mix, atol=1e-5, rtol=1e-5)

    # Force the two-pass fallback so the large-shape code path is exercised.
    out_t = adaptive_norm(x, w0, w1, gamma, beta, force_two_pass=True)
    jax.block_until_ready(out_t)
    assert jnp.allclose(out_t, ref_mix, atol=1e-5, rtol=1e-5)

    print("KERNEL_OK")
</pallas_src>

<mosaic_0001>
module attributes {stable_mosaic.version = 11 : i64} {
  func.func @_fused_kernel(%arg0: i32, %arg1: memref<2xf32, #tpu.memory_space<smem>>, %arg2: memref<4x1xf32, #tpu.memory_space<vmem>>, %arg3: memref<4x1xf32, #tpu.memory_space<vmem>>, %arg4: memref<2x4x256xf32, #tpu.memory_space<vmem>>, %arg5: memref<2x4x256xf32, #tpu.memory_space<vmem>>) attributes {dimension_semantics = [#tpu.dimension_semantics<parallel>], iteration_bounds = array<i64: 1>, scalar_prefetch = 0 : i64, scratch_operands = 0 : i64, tpu.core_type = #tpu.core_type<tc>, window_params = [{transform_indices = @transform_0, window_bounds = array<i64: 2>}, {transform_indices = @transform_1, window_bounds = array<i64: 4, 1>}, {transform_indices = @transform_2, window_bounds = array<i64: 4, 1>}, {transform_indices = @transform_3, window_bounds = array<i64: 2, 4, 256>}, {transform_indices = @transform_4, window_bounds = array<i64: 2, 4, 256>}]} {
    %c0 = arith.constant 0 : index
    %c0_0 = arith.constant 0 : index
    %c0_1 = arith.constant 0 : index
    %0 = vector.load %arg4[%c0, %c0_0, %c0_1] : memref<2x4x256xf32, #tpu.memory_space<vmem>>, vector<2x4x256xf32>
    %cst = arith.constant dense<0.000000e+00> : vector<4x256xf32>
    %1 = vector.multi_reduction <add>, %0, %cst [0] : vector<2x4x256xf32> to vector<4x256xf32>
    %cst_2 = arith.constant dense<0.000000e+00> : vector<4xf32>
    %2 = vector.multi_reduction <add>, %1, %cst_2 [1] : vector<4x256xf32> to vector<4xf32>
    %3 = vector.shape_cast %2 : vector<4xf32> to vector<4x1xf32>
    %cst_3 = arith.constant 0.001953125 : f32
    %4 = vector.broadcast %cst_3 : f32 to vector<4x1xf32>
    %5 = arith.mulf %3, %4 : vector<4x1xf32>
    %6 = vector.shape_cast %5 : vector<4x1xf32> to vector<1x4x1xf32>
    %7 = vector.broadcast %6 : vector<1x4x1xf32> to vector<2x4x256xf32>
    %8 = arith.subf %0, %7 : vector<2x4x256xf32>
    %9 = arith.mulf %8, %8 : vector<2x4x256xf32>
    %cst_4 = arith.constant dense<0.000000e+00> : vector<4x256xf32>
    %10 = vector.multi_reduction <add>, %9, %cst_4 [0] : vector<2x4x256xf32> to vector<4x256xf32>
    %cst_5 = arith.constant dense<0.000000e+00> : vector<4xf32>
    %11 = vector.multi_reduction <add>, %10, %cst_5 [1] : vector<4x256xf32> to vector<4xf32>
    %12 = vector.shape_cast %11 : vector<4xf32> to vector<4x1xf32>
    %cst_6 = arith.constant 0.001953125 : f32
    %13 = vector.broadcast %cst_6 : f32 to vector<4x1xf32>
    %14 = arith.mulf %12, %13 : vector<4x1xf32>
    %cst_7 = arith.constant 1.000000e-03 : f32
    %15 = vector.broadcast %cst_7 : f32 to vector<4x1xf32>
    %16 = arith.addf %14, %15 : vector<4x1xf32>
    %17 = math.rsqrt %16 : vector<4x1xf32>
    %c0_8 = arith.constant 0 : index
    %c0_9 = arith.constant 0 : index
    %18 = vector.load %arg2[%c0_8, %c0_9] : memref<4x1xf32, #tpu.memory_space<vmem>>, vector<4x1xf32>
    %c0_10 = arith.constant 0 : index
    %c0_11 = arith.constant 0 : index
    %19 = vector.load %arg3[%c0_10, %c0_11] : memref<4x1xf32, #tpu.memory_space<vmem>>, vector<4x1xf32>
    %c0_12 = arith.constant 0 : index
    %20 = memref.load %arg1[%c0_12] : memref<2xf32, #tpu.memory_space<smem>>
    %c1 = arith.constant 1 : index
    %21 = memref.load %arg1[%c1] : memref<2xf32, #tpu.memory_space<smem>>
    %22 = vector.broadcast %21 : f32 to vector<4x1xf32>
    %23 = arith.mulf %22, %18 : vector<4x1xf32>
    %24 = arith.mulf %23, %17 : vector<4x1xf32>
    %25 = vector.broadcast %20 : f32 to vector<4x1xf32>
    %26 = arith.addf %25, %24 : vector<4x1xf32>
    %27 = arith.mulf %18, %5 : vector<4x1xf32>
    %28 = arith.mulf %27, %17 : vector<4x1xf32>
    %29 = arith.subf %19, %28 : vector<4x1xf32>
    %30 = vector.broadcast %21 : f32 to vector<4x1xf32>
    %31 = arith.mulf %30, %29 : vector<4x1xf32>
    %32 = vector.shape_cast %26 : vector<4x1xf32> to vector<1x4x1xf32>
    %33 = vector.broadcast %32 : vector<1x4x1xf32> to vector<2x4x256xf32>
    %34 = arith.mulf %0, %33 : vector<2x4x256xf32>
    %35 = vector.shape_cast %31 : vector<4x1xf32> to vector<1x4x1xf32>
    %36 = vector.broadcast %35 : vector<1x4x1xf32> to vector<2x4x256xf32>
    %37 = arith.addf %34, %36 : vector<2x4x256xf32>
    %c0_13 = arith.constant 0 : index
    %c0_14 = arith.constant 0 : index
    %c0_15 = arith.constant 0 : index
    %38 = vector.load %arg5[%c0_13, %c0_14, %c0_15] : memref<2x4x256xf32, #tpu.memory_space<vmem>>, vector<2x4x256xf32>
    tpu.vector_store %arg5[%c0_13, %c0_14, %c0_15], %37 {strides = array<i32>} : memref<2x4x256xf32, #tpu.memory_space<vmem>>, vector<2x4x256xf32>,
    return
  }
  func.func @transform_0(%arg0: i32) -> i32 {
    %c0_i32 = arith.constant 0 : i32
    %c0_i32_0 = arith.constant 0 : i32
    return %c0_i32 : i32
  }
  func.func @transform_1(%arg0: i32) -> (i32, i32) {
    %c0_i32 = arith.constant 0 : i32
    %c0_i32_0 = arith.constant 0 : i32
    return %arg0, %c0_i32 : i32, i32
  }
  func.func @transform_2(%arg0: i32) -> (i32, i32) {
    %c0_i32 = arith.constant 0 : i32
    %c0_i32_0 = arith.constant 0 : i32
    return %arg0, %c0_i32 : i32, i32
  }
  func.func @transform_3(%arg0: i32) -> (i32, i32, i32) {
    %c0_i32 = arith.constant 0 : i32
    %c0_i32_0 = arith.constant 0 : i32
    %c0_i32_1 = arith.constant 0 : i32
    return %c0_i32, %arg0, %c0_i32_0 : i32, i32, i32
  }
  func.func @transform_4(%arg0: i32) -> (i32, i32, i32) {
    %c0_i32 = arith.constant 0 : i32
    %c0_i32_0 = arith.constant 0 : i32
    %c0_i32_1 = arith.constant 0 : i32
    return %c0_i32, %arg0, %c0_i32_0 : i32, i32, i32
  }
}

</mosaic_0001>

<llo_original>
// kernel: tpu_custom_call.1
$region0: #{tpu_custom_call.1}
  #allocation0 [shape = 'u32[]', space=smem, size = 0x4, offset = 0x4, fixed_abs, tag = 'smem constant byte address 0x4 - core index']
  #allocation1 [shape = 'u32[144,128]{1,0:T(1,128)}', space=vmem, size = 0x12000, scoped, tag = 'internal scratch']
  %s0 = inlined_call_operand.vmem [shape: f32[2], index: 0, kind: input, shape index: {}]
  %s1 = inlined_call_operand.vmem [shape: f32[4,1], index: 1, kind: input, shape index: {}]
  %s2 = inlined_call_operand.vmem [shape: f32[4,1], index: 2, kind: input, shape index: {}]
  %s3 = inlined_call_operand.hbm [shape: f32[2,4,256], index: 3, kind: input, shape index: {}]
  %s4 = inlined_call_operand.hbm [shape: f32[2,4,256], index: 4, kind: output, shape index: {}]
  %s5 = sld [smem:[#allocation0]]
  $region34: #{tpu_custom_call.1} parent=0
    _
  %s7 = ssub.s32 1, %s5
  %s8 = scalar_select 0, %s7, %s5
  $region1: #{tpu_custom_call.1} parent=0
    #allocation2 [shape = 'u8[512]{0}', space=smem, size = 0x200, scoped, tag = 'input window, operand 0, single buffered']
    #allocation3 [shape = 's32[1]{0}', space=sflag, size = 0x4, scoped, tag = 'scoped memory for tpu_custom_call.1']
    #allocation4 [shape = 's32[1]{0}', space=sflag, size = 0x4, scoped, tag = 'scoped memory for tpu_custom_call.1']
    #allocation5 [shape = 's32[1]{0}', space=sflag, size = 0x4, scoped, tag = 'scoped memory for tpu_custom_call.1']
    #allocation6 [shape = 'u8[8192]{0}', space=vmem, size = 0x2000, scoped, tag = 'input window, operand 3, single buffered']
    #allocation7 [shape = 'u8[8192]{0}', space=vmem, size = 0x2000, scoped, tag = 'output window, operand 0, single buffered']
    %9 = vsyncpa [#allocation5], 0
    %10 = vsyncpa [#allocation3], 0
    %11 = vsyncpa [#allocation4], 0
    // Predicated region
    $region2: #{tpu_custom_call.1} parent=1 // pred_check
      _
    $region3: #{tpu_custom_call.1} parent=1 // pred_check_branch
      %13 = sbr.rel (0) target = $region5
    $region4: #{tpu_custom_call.1} parent=1 // pred_region
      %s15 = ssub.s32 16, 16
      %16 = vsyncadd [#allocation5], %s15
      %s18 = sshll.u32 %s0, 4
      %s19 = int_to_ptr.vmem [resolvable:$true] %s18
      %21 = dma.vmem_to_smem %s19, 16, [#allocation2], [#allocation5]
    $region5: #{tpu_custom_call.1} parent=1 // pred_fallthru
      _
    // Predicated region
    $region6: #{tpu_custom_call.1} parent=1 // pred_check
      _
    $region7: #{tpu_custom_call.1} parent=1 // pred_check_branch
      %23 = sbr.rel (0) target = $region9
    $region8: #{tpu_custom_call.1} parent=1 // pred_region
      _
    $region9: #{tpu_custom_call.1} parent=1 // pred_fallthru
      _
    // Predicated region
    $region10: #{tpu_custom_call.1} parent=1 // pred_check
      _
    $region11: #{tpu_custom_call.1} parent=1 // pred_check_branch
      %25 = sbr.rel (0) target = $region13
    $region12: #{tpu_custom_call.1} parent=1 // pred_region
      _
    $region13: #{tpu_custom_call.1} parent=1 // pred_fallthru
      _
    // Predicated region
    $region14: #{tpu_custom_call.1} parent=1 // pred_check
      _
    $region15: #{tpu_custom_call.1} parent=1 // pred_check_branch
      %27 = sbr.rel (0) target = $region17
    $region16: #{tpu_custom_call.1} parent=1 // pred_region
      %s29 = ssub.s32 256, 256
      %30 = vsyncadd [#allocation3], %s29
      %s31 = sshll.u32 [#allocation6], 4
      %s32 = int_to_ptr.vmem [resolvable:$true] %s31
      %37 = dma.hbm_to_vmem [thread:$0]  %s3, 256, %s32, [#allocation3], 128, 128, 8
    $region17: #{tpu_custom_call.1} parent=1 // pred_fallthru
      _
    // Predicated region
    $region18: #{tpu_custom_call.1} parent=1 // pred_check
      _
    $region19: #{tpu_custom_call.1} parent=1 // pred_check_branch
      %39 = sbr.rel (0) target = $region21
    $region20: #{tpu_custom_call.1} parent=1 // pred_region
      %40 = dma.done [#allocation5], 16
    $region21: #{tpu_custom_call.1} parent=1 // pred_fallthru
      _
    // Predicated region
    $region22: #{tpu_custom_call.1} parent=1 // pred_check
      _
    $region23: #{tpu_custom_call.1} parent=1 // pred_check_branch
      %42 = sbr.rel (0) target = $region25
    $region24: #{tpu_custom_call.1} parent=1 // pred_region
      %43 = dma.done [#allocation3], 256
    $region25: #{tpu_custom_call.1} parent=1 // pred_fallthru
      _
    %44 = sfence
    %v45 = vld [vmem:[#allocation6] sm:$0xff]
    %v46 = vld [vmem:[#allocation6 + $0x8] sm:$0xff]
    %v49 = vcombine.high %v45, %v45
    %v50 = vcombine.high %v46, %v46
    %vm53 = vcmask 1043456
    %v54 = vsel %vm53, %v45, 0.0
    %v55 = vsel %vm53, %v46, 0.0
    %v56 = vadd.f32 %v54, %v55
    %v57 = vsel %vm53, %v49, 0.0
    %v58 = vsel %vm53, %v50, 0.0
    %v59 = vadd.f32 %v57, %v58
    %v60 = vsel %vm53, %v56, 0.0
    %v61 = vsel %vm53, %v59, 0.0
    %v62 = vadd.f32 %v60, %v61
    %63 = vadd.xlane.f32.xlu0 %v62
    %v64 = vpop.xlane.xlu0 %63
    %v65 = vmul.f32 %v64, 0.001953125
    %v68 = vunpack.c.l.s4 839922192
    %v69 = vunpack.c.0.s8 %v68
    %v70 = vlaneseq
    %v71 = vshrl.u32 %v70, 7
    %v72 = vsub.s32 %v69, %v71
    %v73 = vrot.slane %v65, %v72
    %v75 = vsub.f32 %v45, %v73
    %v76 = vsub.f32 %v46, %v73
    %v77 = vmul.f32 %v75, %v75
    %v78 = vmul.f32 %v76, %v76
    %v81 = vcombine.high %v77, %v77
    %v82 = vcombine.high %v78, %v78
    %v85 = vsel %vm53, %v77, 0.0
    %v86 = vsel %vm53, %v78, 0.0
    %v87 = vadd.f32 %v85, %v86
    %v88 = vsel %vm53, %v81, 0.0
    %v89 = vsel %vm53, %v82, 0.0
    %v90 = vadd.f32 %v88, %v89
    %v91 = vsel %vm53, %v87, 0.0
    %v92 = vsel %vm53, %v90, 0.0
    %v93 = vadd.f32 %v91, %v92
    %94 = vadd.xlane.f32.xlu0 %v93
    %v95 = vpop.xlane.xlu0 %94
    %v96 = vmul.f32 %v95, 0.001953125
    %v97 = vadd.f32 %v96, 0.001
    %v98 = vrsqrt.pop %v97
    %v99 = vld [vmem:[%s1] sm:$0xf]
    %v100 = vld [vmem:[%s2] sm:$0xf]
    %s101 = sld [smem:[#allocation2]]
    %s102 = sld [smem:[#allocation2 + $0x1]]
    %v103 = vstv %s102
    %v104 = vmul.f32 %v103, %v99
    %v105 = vmul.f32 %v104, %v98
    %v106 = vstv %s101
    %v107 = vadd.f32 %v106, %v105
    %v108 = vmul.f32 %v99, %v65
    %v109 = vmul.f32 %v108, %v98
    %v110 = vsub.f32 %v100, %v109
    %v111 = vmul.f32 %v103, %v110
    %113 = vset.pattern.permute.xlu0 0
    %114 = vperm.xlu0 %113, %v107
    %v115 = vpop.permute.xlu0 %114
    %v117 = vunpack.c.l.s4 839922192
    %v118 = vunpack.c.0.s8 %v117
    %v119 = vlaneseq
    %v120 = vshrl.u32 %v119, 7
    %v121 = vsub.s32 %v118, %v120
    %v122 = vrot.slane %v115, %v121
    %v124 = vmul.f32 %v45, %v122
    %v125 = vmul.f32 %v46, %v122
    %127 = vset.pattern.permute.xlu0 0
    %128 = vperm.xlu0 %127, %v111
    %v129 = vpop.permute.xlu0 %128
    %v131 = vunpack.c.l.s4 839922192
    %v132 = vunpack.c.0.s8 %v131
    %v133 = vlaneseq
    %v134 = vshrl.u32 %v133, 7
    %v135 = vsub.s32 %v132, %v134
    %v136 = vrot.slane %v129, %v135
    %v138 = vadd.f32 %v124, %v136
    %v139 = vadd.f32 %v125, %v136
    %140 = vst [vmem:[#allocation7] sm:$0xff] %v138
    %141 = vst [vmem:[#allocation7 + $0x8] sm:$0xff] %v139
    // Predicated region
    $region26: #{tpu_custom_call.1} parent=1 // pred_check
      _
    $region27: #{tpu_custom_call.1} parent=1 // pred_check_branch
      %143 = sbr.rel (0) target = $region29
    $region28: #{tpu_custom_call.1} parent=1 // pred_region
      %s145 = ssub.s32 256, 256
      %146 = vsyncadd [#allocation4], %s145
      %s147 = sshll.u32 [#allocation7], 4
      %s148 = int_to_ptr.vmem [resolvable:$true] %s147
      %153 = dma.vmem_to_hbm [thread:$0]  %s148, 256, %s4, [#allocation4], 128, 128, 8
    $region29: #{tpu_custom_call.1} parent=1 // pred_fallthru
      _
    // Predicated region
    $region30: #{tpu_custom_call.1} parent=1 // pred_check
      _
    $region31: #{tpu_custom_call.1} parent=1 // pred_check_branch
      %155 = sbr.rel (0) target = $region33
    $region32: #{tpu_custom_call.1} parent=1 // pred_region
      %156 = dma.done [#allocation4], 256
    $region33: #{tpu_custom_call.1} parent=1 // pred_fallthru
      _
    %157 = vsyncpa [#allocation3], 1
    %158 = vsyncpa [#allocation4], 1
    %159 = vsyncpa [#allocation5], 1

</llo_original>
